<compile_context>
chip_gen: v5e
topology: v5e:2x2
jax: 0.10.0
libtpu: 0.0.40
codegen_flags: <defaults>
</compile_context>

<pallas_src>
import math

import jax
import jax.numpy as jnp
from jax import lax
from jax.experimental import pallas as pl
from jax.experimental.pallas import tpu as pltpu


# Largest pixel (lane) tile for the generic matmul kernel.  1024 lanes keeps
# double-buffered blocks comfortably inside the default scoped-VMEM limit on
# every generation (v7x has only 64 MiB physical VMEM).            (review #8)
_MAX_PIXEL_TILE = 1024

# Rough VMEM budget for the fully fused per-level kernel (full feature map per
# batch element resident in VMEM).  Above this we fall back to tiled im2col.
_FUSE_BYTES_BUDGET = 16 * 1024 * 1024

_FUSED_LEVEL_STATE = {"ok": None}


# ----------------------------- in-kernel helpers ----------------------------

def _shift_lanes(x, s):
    """y[..., p] = x[..., p - s] along the last (lane) axis, zero fill (static s)."""
    if s == 0:
        return x
    P = x.shape[-1]
    fill = jnp.zeros(x.shape[:-1] + (abs(s),), x.dtype)
    if s > 0:
        return jnp.concatenate([fill, x[..., :P - s]], axis=-1)
    return jnp.concatenate([x[..., -s:], fill], axis=-1)


def _make_level_kernel(Hf, Wf, cdt, has_res):
    """Fused: last_inner = 1x1(x) [+ top_down];  out = 3x3(last_inner).

    All operands are laid out (channels, pixels): channels on sublanes, the
    flattened H*W pixels on lanes -> lane-dense MXU outputs and stores.
    The 3x3 taps are produced in-kernel by shifting the flattened map along the
    lane axis and masking row/column wrap-around, so no im2col hits HBM.
    """
    P = Hf * Wf

    def kernel(*refs):
        if has_res:
            (x_ref, w_in_ref, b_in_ref, res_ref,
             w_ly_ref, b_ly_ref, inner_ref, out_ref) = refs
        else:
            (x_ref, w_in_ref, b_in_ref,
             w_ly_ref, b_ly_ref, inner_ref, out_ref) = refs
            res_ref = None

        # ---- lateral 1x1 conv (+ fused top-down add), f32 accumulate ----
        x = x_ref[0].astype(cdt)                                    # (Ci, P)
        lat = (jnp.dot(w_in_ref[...], x, preferred_element_type=jnp.float32)
               + b_in_ref[...])
        if res_ref is not None:
            lat = lat + res_ref[0]                                  # f32 add
        inner_ref[0] = lat                                          # last_inner

        # ---- 3x3 / stride-1 smooth conv on the VMEM-resident last_inner ----
        li = lat.astype(cdt)
        col = lax.broadcasted_iota(jnp.int32, (1, P), 1)
        wcol = col % Wf
        hrow = col // Wf
        taps = []
        for kh in range(3):                      # K order = (kh, kw, ci)
            for kw in range(3):
                dh, dw = 1 - kh, 1 - kw
                s = dh * Wf + dw
                t = _shift_lanes(li, s)
                if s != 0:
                    valid = ((wcol - dw >= 0) & (wcol - dw < Wf) &
                             (hrow - dh >= 0) & (hrow - dh < Hf))
                    t = jnp.where(valid, t, jnp.zeros_like(t))
                taps.append(t)
        patches = jnp.concatenate(taps, axis=0)                     # (9*Co, P)
        out_ref[0] = (jnp.dot(w_ly_ref[...], patches,
                              preferred_element_type=jnp.float32)
                      + b_ly_ref[...])

    return kernel


# ------------------------------ Pallas wrappers ------------------------------

def _fused_level_call(x_flat, w_in, b_in, res_flat, w_ly, b_ly, Hf, Wf):
    """One pallas_call per pyramid level. Returns (last_inner, smoothed), both f32."""
    N, Ci, P = x_flat.shape
    Co = w_in.shape[0]
    has_res = res_flat is not None
    kernel = _make_level_kernel(Hf, Wf, w_in.dtype, has_res)

    in_specs = [pl.BlockSpec((1, Ci, P), lambda n: (n, 0, 0)),
                pl.BlockSpec(w_in.shape, lambda n: (0, 0)),
                pl.BlockSpec(b_in.shape, lambda n: (0, 0))]
    args = [x_flat, w_in, b_in]
    if has_res:
        in_specs.append(pl.BlockSpec((1, Co, P), lambda n: (n, 0, 0)))
        args.append(res_flat)
    in_specs += [pl.BlockSpec(w_ly.shape, lambda n: (0, 0)),
                 pl.BlockSpec(b_ly.shape, lambda n: (0, 0))]
    args += [w_ly, b_ly]

    o_spec = pl.BlockSpec((1, Co, P), lambda n: (n, 0, 0))
    out = pl.pallas_call(
        kernel,
        grid=(N,),
        in_specs=in_specs,
        out_specs=[o_spec, o_spec],
        out_shape=[jax.ShapeDtypeStruct((N, Co, P), jnp.float32),
                   jax.ShapeDtypeStruct((N, Co, P), jnp.float32)],
        compiler_params=pltpu.CompilerParams(dimension_semantics=("parallel",)),
    )(*args)
    return out[0], out[1]


def _mm_bias(rhs, w_mat, b, residual=None, relu_rhs=False):
    """out[n, :, p] = w_mat @ (relu?)(rhs[n, :, p]) + b (+ residual[n, :, p]).

    rhs: (N, K, P);  w_mat: (Co, K);  b: (Co, 1) f32;  residual: (N, Co, P) f32.
    Output pixels are the lane axis -> dense, unmasked stores.
    """
    N, K, P = rhs.shape
    Co = w_mat.shape[0]
    cdt = w_mat.dtype
    has_res = residual is not None
    TP = P if P <= _MAX_PIXEL_TILE else _MAX_PIXEL_TILE
    grid = (N, pl.cdiv(P, TP))

    def kernel(x_ref, w_ref, b_ref, *rest):
        o_ref = rest[-1]
        x = x_ref[0].astype(cdt)
        if relu_rhs:
            # relu commutes with the bf16 cast and with zero padding.
            x = jnp.maximum(x, 0)
        acc = (jnp.dot(w_ref[...], x, preferred_element_type=jnp.float32)
               + b_ref[...])
        if has_res:
            acc = acc + rest[0][0]
        o_ref[0] = acc

    in_specs = [pl.BlockSpec((1, K, TP), lambda n, t: (n, 0, t)),
                pl.BlockSpec((Co, K), lambda n, t: (0, 0)),
                pl.BlockSpec((Co, 1), lambda n, t: (0, 0))]
    args = [rhs, w_mat, b]
    if has_res:
        in_specs.append(pl.BlockSpec((1, Co, TP), lambda n, t: (n, 0, t)))
        args.append(residual)

    return pl.pallas_call(
        kernel,
        grid=grid,
        in_specs=in_specs,
        out_specs=pl.BlockSpec((1, Co, TP), lambda n, t: (n, 0, t)),
        out_shape=jax.ShapeDtypeStruct((N, Co, P), jnp.float32),
        compiler_params=pltpu.CompilerParams(
            dimension_semantics=("parallel", "parallel")),
    )(*args)


# ------------------------------- conv wrappers -------------------------------

def _im2col_taps(x, ksize, stride, pad):
    """x: NCHW -> (N, ksize*ksize*C, Ho*Wo) with K ordered (kh, kw, ci)."""
    N, C, H, W = x.shape
    xp = jnp.pad(x, ((0, 0), (0, 0), (pad, pad), (pad, pad)))
    Ho = (H + 2 * pad - ksize) // stride + 1
    Wo = (W + 2 * pad - ksize) // stride + 1
    taps = []
    for kh in range(ksize):
        for kw in range(ksize):
            taps.append(xp[:, :, kh:kh + stride * Ho:stride,
                           kw:kw + stride * Wo:stride])
    patches = jnp.stack(taps, axis=1)                 # (N, k*k, C, Ho, Wo)
    return patches.reshape(N, ksize * ksize * C, Ho * Wo), Ho, Wo


def conv1x1(x, p, residual=None):
    N, C, H, W = x.shape
    rhs = x.reshape(N, C, H * W)                      # no im2col for 1x1 convs
    res = None if residual is None else residual.reshape(N, -1, H * W)
    out = _mm_bias(rhs, p["w_mat"], p["b"], residual=res)
    return out.reshape(N, -1, H, W)


def conv3x3_s1_im2col(x, p):
    # Fallback path for the 3x3 stride-1 smooth convs (patches cast to the
    # compute dtype so the materialised im2col matrix is half-width in bf16).
    N = x.shape[0]
    patches, Ho, Wo = _im2col_taps(x, 3, 1, 1)
    out = _mm_bias(patches.astype(p["w_mat"].dtype), p["w_mat"], p["b"])
    return out.reshape(N, -1, Ho, Wo)


def conv3x3_s2(x, p, relu_input=False):
    # p6 / p7: stride-2 3x3 convs on the tiny coarse maps keep the (transposed)
    # im2col path; the input relu for p7 is fused into the kernel.
    N = x.shape[0]
    patches, Ho, Wo = _im2col_taps(x, 3, 2, 1)
    out = _mm_bias(patches.astype(p["w_mat"].dtype), p["w_mat"], p["b"],
                   relu_rhs=relu_input)
    return out.reshape(N, -1, Ho, Wo)


# -------------------- fused level kernel: probe + dispatch -------------------

def _probe_fused_level():
    """Compile+run the fused level kernel once (f32) and check it against the
    im2col path; on any failure we silently fall back for the whole run."""
    try:
        k1, k2, k3, k4 = jax.random.split(jax.random.PRNGKey(123), 4)
        Ci, Co, H, W = 8, 8, 8, 8
        x = jax.random.normal(k1, (1, Ci, H, W), jnp.float32)
        w_in = jax.random.normal(k2, (Co, Ci), jnp.float32) * 0.3
        w_ly = jax.random.normal(k3, (Co, 9 * Co), jnp.float32) * 0.1
        res = jax.random.normal(k4, (1, Co, H, W), jnp.float32)
        b = jnp.zeros((Co, 1), jnp.float32)

        inner_f, out_f = _fused_level_call(
            x.reshape(1, Ci, H * W), w_in, b,
            res.reshape(1, Co, H * W), w_ly, b, H, W)

        inner_r = conv1x1(x, {"w_mat": w_in, "b": b}, residual=res)
        out_r = conv3x3_s1_im2col(inner_r, {"w_mat": w_ly, "b": b})
        ok = (bool(jnp.allclose(inner_f.reshape(inner_r.shape), inner_r,
                                atol=1e-3, rtol=1e-3)) and
              bool(jnp.allclose(out_f.reshape(out_r.shape), out_r,
                                atol=1e-3, rtol=1e-3)))
    except Exception:
        ok = False
    return ok


def _fused_level_available():
    if _FUSED_LEVEL_STATE["ok"] is None:
        _FUSED_LEVEL_STATE["ok"] = _probe_fused_level()
    return _FUSED_LEVEL_STATE["ok"]


def fpn_level(x, inner_p, layer_p, top_down=None):
    """One pyramid level: last_inner = 1x1(x) [+ top_down]; out = 3x3(last_inner)."""
    N, Ci, H, W = x.shape
    P = H * W
    Co = layer_p["w_mat"].shape[0]
    fits = P * 4 * (Ci + 14 * Co) <= _FUSE_BYTES_BUDGET
    if fits and _fused_level_available():
        res = None if top_down is None else top_down.reshape(N, Co, P)
        inner, out = _fused_level_call(
            x.reshape(N, Ci, P), inner_p["w_mat"], inner_p["b"], res,
            layer_p["w_mat"], layer_p["b"], H, W)
        return inner.reshape(N, Co, H, W), out.reshape(N, Co, H, W)
    # fallback: two pallas_calls (1x1 lateral + im2col 3x3)
    last_inner = conv1x1(x, inner_p, residual=top_down)
    return last_inner, conv3x3_s1_im2col(last_inner, layer_p)


# ------------------------------ FPN parameters -------------------------------

def _prep_conv(w_hwio, b, compute_dtype):
    """Keep HWIO f32 weights (for the reference) plus the (Co, K) kernel matrix
    in the MXU compute dtype with K ordered (kh, kw, ci)."""
    co = w_hwio.shape[-1]
    w_mat = jnp.transpose(w_hwio, (3, 0, 1, 2)).reshape(co, -1).astype(compute_dtype)
    return {"w_hwio": w_hwio,
            "w_mat": w_mat,
            "b": b.reshape(co, 1).astype(jnp.float32)}


def init_fpn_params(key, in_channels_list, out_channels,
                    in_channels_p6p7, out_channels_p6p7,
                    compute_dtype=jnp.bfloat16):
    def kaiming_uniform(k, shape):
        # kaiming_uniform_(a=1): bound = sqrt(6 / (2 * fan_in)) = sqrt(3 / fan_in)
        fan_in = shape[0] * shape[1] * shape[2]
        bound = math.sqrt(3.0 / fan_in)
        return jax.random.uniform(k, shape, jnp.float32, -bound, bound)

    keys = jax.random.split(key, 2 * len(in_channels_list) + 2)
    zeros = lambda c: jnp.zeros((c,), jnp.float32)
    params = {"inner": [], "layer": []}
    for i, cin in enumerate(in_channels_list):
        w_in = kaiming_uniform(keys[2 * i], (1, 1, cin, out_channels))
        w_ly = kaiming_uniform(keys[2 * i + 1], (3, 3, out_channels, out_channels))
        params["inner"].append(_prep_conv(w_in, zeros(out_channels), compute_dtype))
        params["layer"].append(_prep_conv(w_ly, zeros(out_channels), compute_dtype))
    params["p6"] = _prep_conv(
        kaiming_uniform(keys[-2], (3, 3, in_channels_p6p7, out_channels_p6p7)),
        zeros(out_channels_p6p7), compute_dtype)
    params["p7"] = _prep_conv(
        kaiming_uniform(keys[-1], (3, 3, out_channels_p6p7, out_channels_p6p7)),
        zeros(out_channels_p6p7), compute_dtype)
    return params


# ------------------------------- FPN forward ---------------------------------

def fpn_forward(params, xs_nchw):
    """xs_nchw: list of NCHW feature maps (increasing depth / decreasing res)."""
    xs = [x.astype(jnp.float32) for x in xs_nchw]
    n = len(xs)

    last_inner, out_last = fpn_level(xs[-1], params["inner"][-1],
                                     params["layer"][-1])
    results = [out_last]
    for idx in range(n - 2, -1, -1):
        # TODO(synk): fold this 2x nearest-neighbour upsample into the level
        # kernel (coarse residual block + in-kernel repeat) to remove the
        # full-resolution HBM round trip of the top-down tensor.
        top_down = jnp.repeat(jnp.repeat(last_inner, 2, axis=2), 2, axis=3)
        last_inner, out = fpn_level(xs[idx], params["inner"][idx],
                                    params["layer"][idx], top_down=top_down)
        results.insert(0, out)

    p6 = conv3x3_s2(xs[-1], params["p6"])
    p7 = conv3x3_s2(p6, params["p7"], relu_input=True)
    results.append(p6)
    results.append(p7)
    return tuple(results)


# ------------------------- pure-JAX reference check --------------------------

def _ref_conv(x, w_hwio, b, stride, compute_dtype):
    pad = (w_hwio.shape[0] - 1) // 2
    out = lax.conv_general_dilated(
        x.astype(compute_dtype), w_hwio.astype(compute_dtype),
        (stride, stride), ((pad, pad), (pad, pad)),
        dimension_numbers=("NCHW", "HWIO", "NCHW"),
        preferred_element_type=jnp.float32)
    return out + b.reshape(1, -1, 1, 1)


def fpn_forward_ref(params, xs_nchw, compute_dtype):
    xs = [x.astype(jnp.float32) for x in xs_nchw]
    n = len(xs)
    conv = lambda x, p, s=1: _ref_conv(x, p["w_hwio"], p["b"], s, compute_dtype)

    last_inner = conv(xs[-1], params["inner"][-1])
    results = [conv(last_inner, params["layer"][-1])]
    for idx in range(n - 2, -1, -1):
        top_down = jnp.repeat(jnp.repeat(last_inner, 2, axis=2), 2, axis=3)
        last_inner = conv(xs[idx], params["inner"][idx]) + top_down
        results.insert(0, conv(last_inner, params["layer"][idx]))
    p6 = conv(xs[-1], params["p6"], 2)
    p7 = conv(jnp.maximum(p6, 0.0), params["p7"], 2)
    results.append(p6)
    results.append(p7)
    return tuple(results)


# ----------------------------------- main -------------------------------------

if __name__ == "__main__":
    key = jax.random.PRNGKey(0)
    k_in, k_par = jax.random.split(key)

    in_channels_list = [4, 8, 16]
    out_channels = 8
    in_channels_p6p7 = 16
    out_channels_p6p7 = 8

    kx0, kx1, kx2 = jax.random.split(k_in, 3)
    xs = [
        jax.random.normal(kx0, (2, 4, 16, 16), jnp.float32),   # NCHW
        jax.random.normal(kx1, (2, 8, 8, 8), jnp.float32),
        jax.random.normal(kx2, (2, 16, 4, 4), jnp.float32),
    ]

    expected_shapes = [(2, 8, 16, 16), (2, 8, 8, 8), (2, 8, 4, 4),
                       (2, 8, 2, 2), (2, 8, 1, 1)]

    # Check once at f32 compute (tight tolerance: validates layout/indexing),
    # then at bf16 compute (the production mode from the perf review).
    for cdt, tol in ((jnp.float32, 2e-4), (jnp.bfloat16, 2e-2)):
        params = init_fpn_params(k_par, in_channels_list, out_channels,
                                 in_channels_p6p7, out_channels_p6p7,
                                 compute_dtype=cdt)
        outs = jax.block_until_ready(fpn_forward(params, xs))
        refs = jax.block_until_ready(fpn_forward_ref(params, xs, cdt))
        assert len(outs) == 5
        for o, r, es in zip(outs, refs, expected_shapes):
            assert o.shape == es, (o.shape, es)
            err = float(jnp.max(jnp.abs(o - r)))
            assert jnp.allclose(o, r, atol=tol, rtol=tol), \
                ("mismatch vs reference", str(cdt), es, err)

    print("KERNEL_OK")
</pallas_src>

<mosaic_0001>
module attributes {stable_mosaic.version = 11 : i64} {
  func.func @kernel(%arg0: i32, %arg1: i32, %arg2: memref<1x16x16xf32, #tpu.memory_space<vmem>>, %arg3: memref<8x16xf32, #tpu.memory_space<vmem>>, %arg4: memref<8x1xf32, #tpu.memory_space<vmem>>, %arg5: memref<1x8x16xf32, #tpu.memory_space<vmem>>) attributes {dimension_semantics = [#tpu.dimension_semantics<parallel>, #tpu.dimension_semantics<parallel>], iteration_bounds = array<i64: 2, 1>, scalar_prefetch = 0 : i64, scratch_operands = 0 : i64, tpu.core_type = #tpu.core_type<tc>, window_params = [{transform_indices = @transform_0, window_bounds = array<i64: 1, 16, 16>}, {pipeline_mode = #tpu.pipeline_mode<synchronous>, transform_indices = @transform_1, window_bounds = array<i64: 8, 16>}, {pipeline_mode = #tpu.pipeline_mode<synchronous>, transform_indices = @transform_2, window_bounds = array<i64: 8, 1>}, {transform_indices = @transform_3, window_bounds = array<i64: 1, 8, 16>}]} {
    %c0 = arith.constant 0 : index
    %c0_0 = arith.constant 0 : index
    %c0_1 = arith.constant 0 : index
    %0 = vector.load %arg2[%c0, %c0_0, %c0_1] : memref<1x16x16xf32, #tpu.memory_space<vmem>>, vector<1x16x16xf32>
    %1 = vector.shape_cast %0 : vector<1x16x16xf32> to vector<16x16xf32>
    %c0_2 = arith.constant 0 : index
    %c0_3 = arith.constant 0 : index
    %2 = vector.load %arg3[%c0_2, %c0_3] : memref<8x16xf32, #tpu.memory_space<vmem>>, vector<8x16xf32>
    %cst = arith.constant dense<0.000000e+00> : vector<8x16xf32>
    %3 = tpu.matmul %2, %1, %cst {dimension_numbers = #tpu.dot_dimension_numbers<[1], [0], [0], [1], [0, 0, 1, 1], [], []>} : vector<8x16xf32>, vector<16x16xf32>, vector<8x16xf32> -> vector<8x16xf32>
    %c0_4 = arith.constant 0 : index
    %c0_5 = arith.constant 0 : index
    %4 = vector.load %arg4[%c0_4, %c0_5] : memref<8x1xf32, #tpu.memory_space<vmem>>, vector<8x1xf32>
    %5 = vector.broadcast %4 : vector<8x1xf32> to vector<8x16xf32>
    %6 = arith.addf %3, %5 : vector<8x16xf32>
    %c0_6 = arith.constant 0 : index
    %c0_7 = arith.constant 0 : index
    %c0_8 = arith.constant 0 : index
    %7 = vector.load %arg5[%c0_6, %c0_7, %c0_8] : memref<1x8x16xf32, #tpu.memory_space<vmem>>, vector<1x8x16xf32>
    %8 = vector.shape_cast %7 : vector<1x8x16xf32> to vector<8x16xf32>
    %9 = vector.shape_cast %6 : vector<8x16xf32> to vector<1x8x16xf32>
    tpu.vector_store %arg5[%c0_6, %c0_7, %c0_8], %9 {strides = array<i32>} : memref<1x8x16xf32, #tpu.memory_space<vmem>>, vector<1x8x16xf32>,
    return
  }
  func.func @transform_0(%arg0: i32, %arg1: i32) -> (i32, i32, i32) {
    %c0_i32 = arith.constant 0 : i32
    %c0_i32_0 = arith.constant 0 : i32
    return %arg0, %c0_i32, %arg1 : i32, i32, i32
  }
  func.func @transform_1(%arg0: i32, %arg1: i32) -> (i32, i32) {
    %c0_i32 = arith.constant 0 : i32
    %c0_i32_0 = arith.constant 0 : i32
    %c0_i32_1 = arith.constant 0 : i32
    return %c0_i32, %c0_i32_0 : i32, i32
  }
  func.func @transform_2(%arg0: i32, %arg1: i32) -> (i32, i32) {
    %c0_i32 = arith.constant 0 : i32
    %c0_i32_0 = arith.constant 0 : i32
    %c0_i32_1 = arith.constant 0 : i32
    return %c0_i32, %c0_i32_0 : i32, i32
  }
  func.func @transform_3(%arg0: i32, %arg1: i32) -> (i32, i32, i32) {
    %c0_i32 = arith.constant 0 : i32
    %c0_i32_0 = arith.constant 0 : i32
    return %arg0, %c0_i32, %arg1 : i32, i32, i32
  }
}

</mosaic_0001>

<llo_original>
// kernel: tpu_custom_call.1
$region0: #{tpu_custom_call.1}
  #allocation0 [shape = 'u32[]', space=smem, size = 0x4, offset = 0x4, fixed_abs, tag = 'smem constant byte address 0x4 - core index']
  #allocation1 [shape = 'u32[72,128]{1,0:T(1,128)}', space=vmem, size = 0x9000, scoped, tag = 'internal scratch']
  %s0 = inlined_call_operand.hbm [shape: f32[2,16,16], index: 0, kind: input, shape index: {}]
  %s1 = inlined_call_operand.vmem [shape: f32[8,16], index: 1, kind: input, shape index: {}]
  %s2 = inlined_call_operand.vmem [shape: f32[8,1], index: 2, kind: input, shape index: {}]
  %s3 = inlined_call_operand.hbm [shape: f32[2,8,16], index: 3, kind: output, shape index: {}]
  %s4 = sld [smem:[#allocation0]]
  $region49: #{tpu_custom_call.1} parent=0
    _
  %s6 = ssub.s32 1, %s4
  %s7 = scalar_select 0, %s6, %s4
  $region1: #{tpu_custom_call.1} parent=0
    #allocation2 [shape = 'u8[16384]{0}', space=vmem, size = 0x4000, scoped, tag = 'input window, operand 0']
    #allocation3 [shape = 's32[2]{0}', space=sflag, size = 0x8, scoped, tag = 'scoped memory for tpu_custom_call.1']
    #allocation4 [shape = 's32[2]{0}', space=sflag, size = 0x8, scoped, tag = 'scoped memory for tpu_custom_call.1']
    #allocation5 [shape = 'u8[8192]{0}', space=vmem, size = 0x2000, scoped, tag = 'output window, operand 0']
    %8 = vsyncpa [#allocation3], 0
    %s9 = scalar_lea.sflag [#allocation3], 1
    %10 = vsyncpa %s9, 0
    %11 = vsyncpa [#allocation4], 0
    %s12 = scalar_lea.sflag [#allocation4], 1
    %13 = vsyncpa %s12, 0
    loop: start=0, step=1, limit=4
    $region2: #{tpu_custom_call.1} parent=1 // loop_pre_header
      _
    $region3: #{tpu_custom_call.1} parent=1 // loop_header
      %s15 = sphi 0, %s19
      %p16 = scmp.ge.s32.totalorder %s15, 4
      %s22 = sphi 0, %s34
      %s23 = sphi 0, %s30
      %s24 = sphi 0, %s22
      %s25 = sphi 0, %s23
      %s26 = sphi 0, %s24
      %s27 = sphi 0, %s25
      %s39 = sphi 0, %s41
      %s42 = sphi 0, %s39
      %s43 = sphi 0, %s42
      %s59 = sphi 0, %s43
      %s63 = sphi 0, %s63
      %s65 = sphi 0, %s63
      %s66 = sphi 0, %s65
      %s80 = sphi 0, %s66
      %s84 = sphi 0, %s84
      %s86 = sphi 0, %s84
      %s87 = sphi 0, %s86
      %s101 = sphi 0, %s87
      %s109 = sphi 0, %s111
      %s112 = sphi 0, %s109
      %s113 = sphi 0, %s112
      %s129 = sphi 0, %s113
    $region4: #{tpu_custom_call.1} parent=1 // loop_header_branch
      %18 = sbr.rel (%p16) target = $region8
    $region5: #{tpu_custom_call.1} parent=1 // loop_body
      %s20 = ssub.s32 %s15, 1
      %s21 = ssub.s32 %s15, 2
      %s28 = sadd.s32 1, %s23
      %p29 = scmp.ge.s32.totalorder %s28, 1
      %s30 = scalar_select %p29, 0, %s28
      %s31 = sadd.s32 1, %s22
      %s32 = scalar_select %p29, %s31, %s22
      %p33 = scmp.ge.s32.totalorder %s32, 2
      %s34 = scalar_select %p33, 0, %s32
      %s35 = ssub.s32 %s22, %s34
      %s36 = ssub.s32 %s23, %s30
      %s37 = sor.u32 %s35, %s36
      %p38 = scmp.eq.s32.totalorder %s37, 0
      %s40 = sadd.s32 %s39, 1
      %s41 = scalar_select %p38, %s39, %s40
      %p44 = pneg %p38
      %p45 = scmp.eq.s32.totalorder %s15, 1
      %p46 = por %p44, %p45
      %p47 = scmp.ne.s32.totalorder %s39, %s42
      %p48 = scmp.eq.s32.totalorder %s15, 0
      %p49 = por %p47, %p48
      %p50 = scmp.ne.s32.totalorder %s39, %s42
      %p51 = scmp.eq.s32.totalorder %s20, 1
      %p52 = por %p50, %p51
      %p53 = scmp.ne.s32.totalorder %s42, %s43
      %p54 = scmp.eq.s32.totalorder %s20, 0
      %p55 = por %p53, %p54
      %p56 = scmp.ne.s32.totalorder %s42, %s43
      %p57 = scmp.eq.s32.totalorder %s21, 1
      %p58 = por %p56, %p57
      %p60 = scmp.ne.s32.totalorder %s43, %s59
      %p61 = scmp.eq.s32.totalorder %s21, 0
      %p62 = por %p60, %p61
      %s64 = sadd.s32 %s63, 1
      %p67 = scmp.eq.s32.totalorder %s15, 1
      %p68 = scmp.ne.s32.totalorder %s63, %s65
      %p69 = scmp.eq.s32.totalorder %s15, 0
      %p70 = por %p68, %p69
      %p71 = scmp.ne.s32.totalorder %s63, %s65
      %p72 = scmp.eq.s32.totalorder %s20, 1
      %p73 = por %p71, %p72
      %p74 = scmp.ne.s32.totalorder %s65, %s66
      %p75 = scmp.eq.s32.totalorder %s20, 0
      %p76 = por %p74, %p75
      %p77 = scmp.ne.s32.totalorder %s65, %s66
      %p78 = scmp.eq.s32.totalorder %s21, 1
      %p79 = por %p77, %p78
      %p81 = scmp.ne.s32.totalorder %s66, %s80
      %p82 = scmp.eq.s32.totalorder %s21, 0
      %p83 = por %p81, %p82
      %s85 = sadd.s32 %s84, 1
      %p88 = scmp.eq.s32.totalorder %s15, 1
      %p89 = scmp.ne.s32.totalorder %s84, %s86
      %p90 = scmp.eq.s32.totalorder %s15, 0
      %p91 = por %p89, %p90
      %p92 = scmp.ne.s32.totalorder %s84, %s86
      %p93 = scmp.eq.s32.totalorder %s20, 1
      %p94 = por %p92, %p93
      %p95 = scmp.ne.s32.totalorder %s86, %s87
      %p96 = scmp.eq.s32.totalorder %s20, 0
      %p97 = por %p95, %p96
      %p98 = scmp.ne.s32.totalorder %s86, %s87
      %p99 = scmp.eq.s32.totalorder %s21, 1
      %p100 = por %p98, %p99
      %p102 = scmp.ne.s32.totalorder %s87, %s101
      %p103 = scmp.eq.s32.totalorder %s21, 0
      %p104 = por %p102, %p103
      %s105 = ssub.s32 %s22, %s34
      %s106 = ssub.s32 %s23, %s30
      %s107 = sor.u32 %s105, %s106
      %p108 = scmp.eq.s32.totalorder %s107, 0
      %s110 = sadd.s32 %s109, 1
      %s111 = scalar_select %p108, %s109, %s110
      %p114 = pneg %p108
      %p115 = scmp.eq.s32.totalorder %s15, 1
      %p116 = por %p114, %p115
      %p117 = scmp.ne.s32.totalorder %s109, %s112
      %p118 = scmp.eq.s32.totalorder %s15, 0
      %p119 = por %p117, %p118
      %p120 = scmp.ne.s32.totalorder %s109, %s112
      %p121 = scmp.eq.s32.totalorder %s20, 1
      %p122 = por %p120, %p121
      %p123 = scmp.ne.s32.totalorder %s112, %s113
      %p124 = scmp.eq.s32.totalorder %s20, 0
      %p125 = por %p123, %p124
      %p126 = scmp.ne.s32.totalorder %s112, %s113
      %p127 = scmp.eq.s32.totalorder %s21, 1
      %p128 = por %p126, %p127
      %p130 = scmp.ne.s32.totalorder %s113, %s129
      %p131 = scmp.eq.s32.totalorder %s21, 0
      %p132 = por %p130, %p131
      %p133 = scmp.le.s32.totalorder 1, %s15
      %p134 = scmp.lt.s32.totalorder %s15, 3
      %p135 = pnand %p133, %p134
      %p136 = pneg %p135
      // Predicated region
      $region9: #{tpu_custom_call.1} parent=5 // pred_check
        _
      $region10: #{tpu_custom_call.1} parent=5 // pred_check_branch
        %138 = sbr.rel (%p135) target = $region12
      $region11: #{tpu_custom_call.1} parent=5 // pred_region
        %s139 = ssub.s32 %s15, 1
        // Predicated region
        $region13: #{tpu_custom_call.1} parent=11 // pred_check
          %p140 = pneg %p76
        $region14: #{tpu_custom_call.1} parent=11 // pred_check_branch
          %142 = sbr.rel (%p140) target = $region16
        $region15: #{tpu_custom_call.1} parent=11 // pred_region
          _
        $region16: #{tpu_custom_call.1} parent=11 // pred_fallthru
          _
        // Predicated region
        $region17: #{tpu_custom_call.1} parent=11 // pred_check
          %p143 = pneg %p97
        $region18: #{tpu_custom_call.1} parent=11 // pred_check_branch
          %145 = sbr.rel (%p143) target = $region20
        $region19: #{tpu_custom_call.1} parent=11 // pred_region
          _
        $region20: #{tpu_custom_call.1} parent=11 // pred_fallthru
          _
      $region12: #{tpu_custom_call.1} parent=5 // pred_fallthru
        _
      %p146 = scmp.lt.s32.totalorder %s15, 2
      // Predicated region
      $region21: #{tpu_custom_call.1} parent=5 // pred_check
        %p147 = pneg %p146
      $region22: #{tpu_custom_call.1} parent=5 // pred_check_branch
        %149 = sbr.rel (%p147) target = $region24
      $region23: #{tpu_custom_call.1} parent=5 // pred_region
        // Predicated region
        $region25: #{tpu_custom_call.1} parent=23 // pred_check
          %p150 = pneg %p49
        $region26: #{tpu_custom_call.1} parent=23 // pred_check_branch
          %152 = sbr.rel (%p150) target = $region28
        $region27: #{tpu_custom_call.1} parent=23 // pred_region
          %s153 = sand.u32 %s39, 1
          %s154 = scalar_lea.sflag [#allocation3], %s153
          %s155 = sand.u32 %s39, 1
          %s156 = smul.addr %s155, 16
          %s157 = scalar_lea.vmem [#allocation2], %s156
          %159 = vsyncadd %s154, 0
          %s160 = smul.addr %s22, 2
          %s161 = sadd.s32 %s23, %s160
          %s162 = smul.addr %s161, 8
          %s163 = scalar_lea.hbm %s0, %s162
          %s164 = sshll.u32 %s163, 4
          %s165 = int_to_ptr.hbm [resolvable:$true] %s164
          %s166 = sshll.u32 %s157, 4
          %s167 = int_to_ptr.vmem [resolvable:$true] %s166
          %172 = dma.hbm_to_vmem [thread:$0]  %s165, 256, %s167, %s154, 128, 128, 8
        $region28: #{tpu_custom_call.1} parent=23 // pred_fallthru
          _
      $region24: #{tpu_custom_call.1} parent=5 // pred_fallthru
        _
      %p173 = scmp.le.s32.totalorder 1, %s15
      %p174 = scmp.lt.s32.totalorder %s15, 3
      %p175 = pnand %p173, %p174
      %p176 = pneg %p175
      // Predicated region
      $region29: #{tpu_custom_call.1} parent=5 // pred_check
        _
      $region30: #{tpu_custom_call.1} parent=5 // pred_check_branch
        %178 = sbr.rel (%p175) target = $region32
      $region31: #{tpu_custom_call.1} parent=5 // pred_region
        %s179 = ssub.s32 %s15, 1
        %s180 = sand.u32 %s42, 1
        %s181 = scalar_lea.sflag [#allocation3], %s180
        %s182 = sand.u32 %s42, 1
        %s183 = smul.addr %s182, 16
        %s184 = scalar_lea.vmem [#allocation2], %s183
        // Predicated region
        $region33: #{tpu_custom_call.1} parent=31 // pred_check
          %p185 = pneg %p55
        $region34: #{tpu_custom_call.1} parent=31 // pred_check_branch
          %187 = sbr.rel (%p185) target = $region36
        $region35: #{tpu_custom_call.1} parent=31 // pred_region
          %189 = dma.done %s181, 256
        $region36: #{tpu_custom_call.1} parent=31 // pred_fallthru
          _
        %s190 = sand.u32 %s42, 1
        %s191 = scalar_lea.sflag [#allocation3], %s190
        %s192 = sand.u32 %s42, 1
        %s193 = smul.addr %s192, 16
        %s194 = scalar_lea.vmem [#allocation2], %s193
        %p195 = pneg %p55
        %p196 = pneg %p52
        %p197 = pneg %p76
        %p198 = pneg %p73
        %p199 = pneg %p97
        %p200 = pneg %p94
        %p201 = pneg %p125
        %p202 = pneg %p122
        %s203 = sand.u32 %s112, 1
        %s204 = scalar_lea.sflag [#allocation4], %s203
        %s205 = sand.u32 %s112, 1
        %s206 = smul.addr %s205, 8
        %s207 = scalar_lea.vmem [#allocation5], %s206
        %v208 = vld [vmem:[%s184] sm:$0xff]
        %v209 = vld [vmem:[%s184 + $0x8] sm:$0xff]
        %v210 = vld [vmem:[%s1] sm:$0xff]
        %v211 = vld [vmem:[%s2] sm:$0xff]
        %213 = vset.pattern.permute.xlu0 0
        %214 = vperm.xlu0 %213, %v211
        %v215 = vpop.permute.xlu0 %214
        %vm217 = vcmask 130048
        %v219 = vsel %vm217, %v210, 0
        %221 = vmatpush.msra.mxu0 0.0
        %222 = vmatpush.msra.mxu0 0.0
        %223 = vmatpush.msra.mxu0 0.0
        %224 = vmatpush.msra.mxu0 0.0
        %225 = vmatpush.msra.mxu0 0.0
        %226 = vmatpush.msra.mxu0 0.0
        %227 = vmatpush.msra.mxu0 0.0
        %228 = vmatpush.msra.mxu0 0.0
        %229 = vmatpush.msra.mxu0 0.0
        %230 = vmatpush.msra.mxu0 0.0
        %231 = vmatpush.msra.mxu0 0.0
        %232 = vmatpush.msra.mxu0 0.0
        %233 = vmatpush.msra.mxu0 0.0
        %234 = vmatpush.msra.mxu0 0.0
        %235 = vmatpush.msra.mxu0 %v209
        %236 = vmatpush.msra.mxu0 %v208
        %237 = vmatmul.f32.gmra.mxu0 %v219
        %v238 = vpop.f32.mrf.mxu0
        %v239 = vadd.f32 %v215, %v238
        %240 = vdwg.mxu0
        %241 = vst.msk [vmem:[%s207] sm:$0xff] %vm217, %v239
        %s242 = sand.u32 %s112, 1
        %s243 = scalar_lea.sflag [#allocation4], %s242
        %s244 = sand.u32 %s112, 1
        %s245 = smul.addr %s244, 8
        %s246 = scalar_lea.vmem [#allocation5], %s245
        // Predicated region
        $region37: #{tpu_custom_call.1} parent=31 // pred_check
          %p247 = pneg %p122
        $region38: #{tpu_custom_call.1} parent=31 // pred_check_branch
          %249 = sbr.rel (%p247) target = $region40
        $region39: #{tpu_custom_call.1} parent=31 // pred_region
          %251 = vsyncadd %s243, 0
          %s252 = sadd.s32 %s25, %s24
          %s253 = smul.addr %s252, 8
          %s254 = scalar_lea.hbm %s3, %s253
          %s256 = sshll.u32 %s246, 4
          %s257 = int_to_ptr.vmem [resolvable:$true] %s256
          %s258 = sshll.u32 %s254, 4
          %s259 = int_to_ptr.hbm [resolvable:$true] %s258
          %261 = dma.vmem_to_hbm [thread:$0]  %s257, 128, %s259, %s243
        $region40: #{tpu_custom_call.1} parent=31 // pred_fallthru
          _
      $region32: #{tpu_custom_call.1} parent=5 // pred_fallthru
        _
      %p262 = scmp.le.s32.totalorder 2, %s15
      // Predicated region
      $region41: #{tpu_custom_call.1} parent=5 // pred_check
        %p263 = pneg %p262
      $region42: #{tpu_custom_call.1} parent=5 // pred_check_branch
        %265 = sbr.rel (%p263) target = $region44
      $region43: #{tpu_custom_call.1} parent=5 // pred_region
        %s266 = ssub.s32 %s15, 2
        // Predicated region
        $region45: #{tpu_custom_call.1} parent=43 // pred_check
          %p267 = pneg %p128
        $region46: #{tpu_custom_call.1} parent=43 // pred_check_branch
          %269 = sbr.rel (%p267) target = $region48
        $region47: #{tpu_custom_call.1} parent=43 // pred_region
          %s270 = sand.u32 %s113, 1
          %s271 = scalar_lea.sflag [#allocation4], %s270
          %s272 = sand.u32 %s113, 1
          %s273 = smul.addr %s272, 8
          %s274 = scalar_lea.vmem [#allocation5], %s273
          %276 = dma.done %s271, 128
        $region48: #{tpu_custom_call.1} parent=43 // pred_fallthru
          _
      $region44: #{tpu_custom_call.1} parent=5 // pred_fallthru
        _
    $region6: #{tpu_custom_call.1} parent=1 // loop_footer
      %s19 = sadd.s32 1, %s15
    $region7: #{tpu_custom_call.1} parent=1 // loop_footer_branch
      %14 = sbr.rel target = $region3
    $region8: #{tpu_custom_call.1} parent=1 // loop_exit
      _
    %277 = vsyncpa [#allocation3], 1
    %s278 = scalar_lea.sflag [#allocation3], 1
    %279 = vsyncpa %s278, 1
    %280 = vsyncpa [#allocation4], 1
    %s281 = scalar_lea.sflag [#allocation4], 1
    %282 = vsyncpa %s281, 1

</llo_original>
